<compile_context>
chip_gen: v5e
topology: v5e:2x2
jax: 0.10.0
libtpu: 0.0.40
codegen_flags: <defaults>
</compile_context>

<pallas_src>
import jax
import jax.numpy as jnp
from jax import lax
from jax.experimental import pallas as pl
from jax.experimental.pallas import tpu as pltpu

KH = KW = 3      # 3x3 convolutions
EPS = 1e-5       # BatchNorm eps
LANE = 128       # TPU lane width


def _sublane(dtype):
    """Sublane packing of a (*,128) vreg tile for this dtype."""
    return 16 if jnp.dtype(dtype).itemsize == 2 else 8


# ----------------------------------------------------------------------------- kernel
def _ya_block_kernel(x_ref, t0_ref, b0_ref, t1_ref, tid_ref, b1_ref, o_ref):
    """One batch-group of the YaBasicBlock forward (7 split-K MXU dots).

    x_ref  : ((H+2)*SUB, WCin_pad)  rows of one group of SUB images, (h, j)
                                    interleaved, one zero image-row of vertical
                                    pad above/below.                [compute dt]
    t0_ref : (3, WCin_pad, W*Cout)  conv_0 block-Toeplitz weight per vertical tap
                                    (BN folded).                    [compute dt]
    b0_ref : (1, W*Cout)            conv_0 folded bias.             [f32]
    t1_ref : (3, W*Cout, W*Cout)    conv_1 block-Toeplitz weight per tap.
    tid_ref: (WCin_pad, W*Cout)     1x1 id_conv block-diagonal weight (BN folded).
    b1_ref : (1, W*Cout)            conv_1 + id_conv folded bias.   [f32]
    o_ref  : (H*SUB, W*Cout)        output rows, same (h, j) ordering.
    """
    m, _ = o_ref.shape
    n = (x_ref.shape[0] - m) // 2          # = SUB (slab rows per image row)
    cdt = x_ref.dtype

    # ---- conv_0: split-K over the 3 vertical taps ------------------------------
    # Tap slices start at 0, SUB, 2*SUB -> sublane-tile aligned => free views.
    x_c = x_ref[n:n + m, :]                                     # center rows (tap 1)
    acc = jnp.dot(x_ref[0:m, :], t0_ref[0], preferred_element_type=jnp.float32)
    acc += jnp.dot(x_c, t0_ref[1], preferred_element_type=jnp.float32)
    acc += jnp.dot(x_ref[2 * n:2 * n + m, :], t0_ref[2],
                   preferred_element_type=jnp.float32)
    # Bias + ReLU in f32, then a single cast to the matmul dtype.
    h = jnp.maximum(acc + b0_ref[...], 0.0).astype(cdt)         # (m, W*Cout)

    # ---- conv_1 (+ fused 1x1 identity): split-K again ---------------------------
    # Vertical taps of h: whole-tile XLU rolls by SUB rows + iota masks implement
    # the vertical 'same' zero padding (shifts preserve j -> images never mix).
    row = lax.broadcasted_iota(jnp.int32, h.shape, 0)
    zero = jnp.zeros_like(h)
    h_m1 = jnp.where(row < n, zero, pltpu.roll(h, shift=n, axis=0))          # h-1
    h_p1 = jnp.where(row >= m - n, zero, pltpu.roll(h, shift=m - n, axis=0))  # h+1

    y = jnp.dot(h_m1, t1_ref[0], preferred_element_type=jnp.float32)
    y += jnp.dot(h, t1_ref[1], preferred_element_type=jnp.float32)
    y += jnp.dot(h_p1, t1_ref[2], preferred_element_type=jnp.float32)
    y += jnp.dot(x_c, tid_ref[...], preferred_element_type=jnp.float32)  # identity

    # ---- merge: ReLU(convs(x) + identity); lane-dense 128-multiple store --------
    o_ref[...] = jnp.maximum(y + b1_ref[...], 0.0).astype(o_ref.dtype)


# ----------------------------------------------------------------------------- weight prep (host, once per layer)
def _toeplitz_conv_weight(w_hwio, width):
    """Fold the horizontal taps + horizontal 'same' zero padding of a KHxKW conv
    into a block-Toeplitz matrix.  Returns (KH, width*Cin, width*Cout)."""
    kh, kw, ci, co = w_hwio.shape
    wi = jnp.arange(width)[:, None]          # input column
    wo = jnp.arange(width)[None, :]          # output column
    kx = wi - wo + kw // 2                   # horizontal tap index
    valid = (kx >= 0) & (kx < kw)
    taps = w_hwio[:, jnp.clip(kx, 0, kw - 1), :, :]           # (kh, wi, wo, ci, co)
    taps = jnp.where(valid[None, :, :, None, None], taps, 0.0)
    taps = jnp.transpose(taps, (0, 1, 3, 2, 4))               # (kh, wi, ci, wo, co)
    return taps.reshape(kh, width * ci, width * co)


def _blockdiag_1x1_weight(w_io, width):
    """1x1 conv weight (Cin, Cout) -> block-diagonal (width*Cin, width*Cout)."""
    ci, co = w_io.shape
    eye = jnp.eye(width, dtype=w_io.dtype)
    t = eye[:, None, :, None] * w_io[None, :, None, :]        # (wi, ci, wo, co)
    return t.reshape(width * ci, width * co)


def prepare_block_params(params, width, compute_dtype=jnp.bfloat16, out_dtype=None):
    """Hoisted, once-per-layer device-constant prep (Toeplitz expand + pad + cast)."""
    kh, kw, cin, cout = params["w0f"].shape
    wcin, wcout = width * cin, width * cout
    assert wcout % LANE == 0, "W*Cout must be a multiple of 128 for lane-dense stores"
    wcin_pad = -(-wcin // LANE) * LANE
    out_dtype = compute_dtype if out_dtype is None else out_dtype

    t0 = _toeplitz_conv_weight(params["w0f"], width)                  # (3, wcin, wcout)
    t0 = jnp.pad(t0, ((0, 0), (0, wcin_pad - wcin), (0, 0))).astype(compute_dtype)
    t1 = _toeplitz_conv_weight(params["w1f"], width).astype(compute_dtype)
    tid = _blockdiag_1x1_weight(params["widf"].reshape(cin, cout), width)
    tid = jnp.pad(tid, ((0, wcin_pad - wcin), (0, 0))).astype(compute_dtype)
    b0 = jnp.tile(params["b0f"], width).reshape(1, wcout).astype(jnp.float32)
    b1 = jnp.tile(params["b1f"] + params["bidf"], width).reshape(1, wcout).astype(jnp.float32)
    return dict(t0=t0, b0=b0, t1=t1, tid=tid, b1=b1, cin=cin, cout=cout,
                wcin_pad=wcin_pad, compute_dtype=compute_dtype, out_dtype=out_dtype)


# ----------------------------------------------------------------------------- layout helpers (hoistable when chaining blocks)
def nchw_to_slab(x_nchw, compute_dtype, wcin_pad):
    """NCHW -> (group, image-row, image-in-group) interleaved row slab with one
    zero image-row of vertical pad; batch padded to SUB-sized groups."""
    n, cin, h, w = x_nchw.shape
    sub = _sublane(compute_dtype)
    n_groups = -(-n // sub)
    wcin = w * cin
    xr = jnp.transpose(x_nchw, (2, 0, 3, 1)).reshape(h, n, wcin)     # (H, N, W*Cin)
    xr = jnp.pad(xr, ((1, 1), (0, n_groups * sub - n), (0, wcin_pad - wcin)))
    xr = xr.reshape(h + 2, n_groups, sub, wcin_pad)
    xr = jnp.transpose(xr, (1, 0, 2, 3))                             # (G, H+2, SUB, L)
    x2d = xr.reshape(n_groups * (h + 2) * sub, wcin_pad).astype(compute_dtype)
    return x2d, n_groups, sub


def slab_to_nchw(out2d, n, cout, h, w, sub):
    n_groups = out2d.shape[0] // (h * sub)
    o = out2d.reshape(n_groups, h, sub, w, cout)
    o = jnp.transpose(o, (0, 2, 4, 1, 3)).reshape(n_groups * sub, cout, h, w)
    return o[:n]


# ----------------------------------------------------------------------------- pallas wrapper
def ya_block_apply_slab(x2d, prep, n_groups, h, w):
    """pallas_call on the slab layout (chain blocks here to skip NCHW round-trips)."""
    sub = _sublane(prep["compute_dtype"])
    rows_in = (h + 2) * sub
    rows_out = h * sub
    wcout = w * prep["cout"]
    return pl.pallas_call(
        _ya_block_kernel,
        out_shape=jax.ShapeDtypeStruct((n_groups * rows_out, wcout), prep["out_dtype"]),
        grid_spec=pltpu.PrefetchScalarGridSpec(
            num_scalar_prefetch=0,
            grid=(n_groups,),                    # independent batch groups, no halo
            in_specs=[
                pl.BlockSpec((rows_in, prep["wcin_pad"]), lambda g: (g, 0)),
                pl.BlockSpec(prep["t0"].shape, lambda g: (0, 0, 0)),
                pl.BlockSpec(prep["b0"].shape, lambda g: (0, 0)),
                pl.BlockSpec(prep["t1"].shape, lambda g: (0, 0, 0)),
                pl.BlockSpec(prep["tid"].shape, lambda g: (0, 0)),
                pl.BlockSpec(prep["b1"].shape, lambda g: (0, 0)),
            ],
            out_specs=pl.BlockSpec((rows_out, wcout), lambda g: (g, 0)),
        ),
        compiler_params=pltpu.CompilerParams(
            dimension_semantics=("parallel",)),  # megacore / v7x 2-TC sharding
    )(x2d, prep["t0"], prep["b0"], prep["t1"], prep["tid"], prep["b1"])


def ya_basic_block_pallas(x_nchw, prep):
    """x_nchw: (N, Cin, H, W) float32 (PyTorch layout). Returns (N, Cout, H, W)."""
    n, cin, h, w = x_nchw.shape
    assert cin == prep["cin"]
    x2d, n_groups, sub = nchw_to_slab(x_nchw, prep["compute_dtype"], prep["wcin_pad"])
    out2d = ya_block_apply_slab(x2d, prep, n_groups, h, w)
    return slab_to_nchw(out2d, n, prep["cout"], h, w, sub)


# ----------------------------------------------------------------------------- params
def _fold_bn(w_hwio, gamma, beta, mean, var, eps=EPS):
    """Fold eval-mode BatchNorm into a bias-free conv (HWIO weight)."""
    scale = gamma / jnp.sqrt(var + eps)                 # (Cout,)
    return w_hwio * scale, beta - mean * scale


def init_params(key, cin, cout, zero_bn=True):
    """Deterministic synthetic params for ConvBnAct layers (conv has no bias)."""
    ks = jax.random.split(key, 15)

    def bn(k0, k1, k2, k3, c, zero=False):
        gamma = jnp.zeros((c,), jnp.float32) if zero else \
            jax.random.uniform(k0, (c,), jnp.float32, 0.5, 1.5)
        beta = 0.1 * jax.random.normal(k1, (c,), jnp.float32)
        mean = 0.1 * jax.random.normal(k2, (c,), jnp.float32)
        var = jax.random.uniform(k3, (c,), jnp.float32, 0.5, 1.5)
        return gamma, beta, mean, var

    w0 = 0.1 * jax.random.normal(ks[0], (KH, KW, cin, cout), jnp.float32)
    w1 = 0.1 * jax.random.normal(ks[1], (KH, KW, cout, cout), jnp.float32)
    wid = 0.1 * jax.random.normal(ks[2], (1, 1, cin, cout), jnp.float32)

    bn0 = bn(ks[3], ks[4], ks[5], ks[6], cout)
    bn1 = bn(ks[7], ks[8], ks[9], ks[10], cout, zero=zero_bn)   # zero_bn default
    bni = bn(ks[11], ks[12], ks[13], ks[14], cout)

    w0f, b0f = _fold_bn(w0, *bn0)
    w1f, b1f = _fold_bn(w1, *bn1)
    widf, bidf = _fold_bn(wid, *bni)
    return {"w0f": w0f, "b0f": b0f, "w1f": w1f, "b1f": b1f,
            "widf": widf, "bidf": bidf}


# ----------------------------------------------------------------------------- reference
def ya_basic_block_ref(x_nchw, p):
    """Pure-JAX (lax.conv) reference of the same forward pass."""
    x = jnp.transpose(x_nchw, (0, 2, 3, 1)).astype(jnp.float32)   # NHWC

    def conv(inp, w, b, pad):
        y = lax.conv_general_dilated(inp, w, (1, 1), pad,
                                     dimension_numbers=("NHWC", "HWIO", "NHWC"))
        return y + b.reshape(1, 1, 1, -1)

    h = jax.nn.relu(conv(x, p["w0f"], p["b0f"], [(1, 1), (1, 1)]))
    y = conv(h, p["w1f"], p["b1f"], [(1, 1), (1, 1)])
    ident = conv(x, p["widf"], p["bidf"], [(0, 0), (0, 0)])
    out = jax.nn.relu(y + ident)
    return jnp.transpose(out, (0, 3, 1, 2))


# ----------------------------------------------------------------------------- main
if __name__ == "__main__":
    N, Cin, Cout, H, W = 2, 4, 8, 16, 16
    key = jax.random.PRNGKey(0)
    kx_, kp_ = jax.random.split(key)
    x = jax.random.normal(kx_, (N, Cin, H, W), jnp.float32)

    ok = True
    # zero_bn=True is the module default (conv_1 BN gamma init'd to 0); also run
    # zero_bn=False so the second conv path is numerically exercised.  Check the
    # f32 path (tight tolerance) and the default bf16 path (bf16 matmuls + bf16
    # output — the intentional accuracy budget, identity branch included).
    for zero_bn in (True, False):
        params = init_params(kp_, Cin, Cout, zero_bn=zero_bn)
        ref = ya_basic_block_ref(x, params)
        for cdt, tol in ((jnp.float32, 2e-4), (jnp.bfloat16, 5e-2)):
            prep = prepare_block_params(params, W, compute_dtype=cdt)  # once / layer
            out = jax.block_until_ready(ya_basic_block_pallas(x, prep))
            out = out.astype(jnp.float32)
            if not (out.shape == ref.shape
                    and bool(jnp.allclose(out, ref, atol=tol, rtol=tol))):
                ok = False
                print("MISMATCH zero_bn=%s dtype=%s max_err=%e" % (
                    zero_bn, jnp.dtype(cdt).name,
                    float(jnp.max(jnp.abs(out - ref)))))

    if ok:
        print("KERNEL_OK")
</pallas_src>

<mosaic_0001>
module attributes {stable_mosaic.version = 11 : i64} {
  func.func @_ya_block_kernel(%arg0: i32, %arg1: memref<144x128xf32, #tpu.memory_space<vmem>>, %arg2: memref<3x128x128xf32, #tpu.memory_space<vmem>>, %arg3: memref<1x128xf32, #tpu.memory_space<vmem>>, %arg4: memref<3x128x128xf32, #tpu.memory_space<vmem>>, %arg5: memref<128x128xf32, #tpu.memory_space<vmem>>, %arg6: memref<1x128xf32, #tpu.memory_space<vmem>>, %arg7: memref<128x128xf32, #tpu.memory_space<vmem>>) attributes {dimension_semantics = [#tpu.dimension_semantics<parallel>], iteration_bounds = array<i64: 1>, scalar_prefetch = 0 : i64, scratch_operands = 0 : i64, tpu.core_type = #tpu.core_type<tc>, window_params = [{transform_indices = @transform_0, window_bounds = array<i64: 144, 128>}, {pipeline_mode = #tpu.pipeline_mode<synchronous>, transform_indices = @transform_1, window_bounds = array<i64: 3, 128, 128>}, {pipeline_mode = #tpu.pipeline_mode<synchronous>, transform_indices = @transform_2, window_bounds = array<i64: 1, 128>}, {pipeline_mode = #tpu.pipeline_mode<synchronous>, transform_indices = @transform_3, window_bounds = array<i64: 3, 128, 128>}, {pipeline_mode = #tpu.pipeline_mode<synchronous>, transform_indices = @transform_4, window_bounds = array<i64: 128, 128>}, {pipeline_mode = #tpu.pipeline_mode<synchronous>, transform_indices = @transform_5, window_bounds = array<i64: 1, 128>}, {transform_indices = @transform_6, window_bounds = array<i64: 128, 128>}]} {
    %c8 = arith.constant 8 : index
    %c0 = arith.constant 0 : index
    %0 = vector.load %arg1[%c8, %c0] : memref<144x128xf32, #tpu.memory_space<vmem>>, vector<128x128xf32>
    %c0_0 = arith.constant 0 : index
    %c0_1 = arith.constant 0 : index
    %1 = vector.load %arg1[%c0_0, %c0_1] : memref<144x128xf32, #tpu.memory_space<vmem>>, vector<128x128xf32>
    %c0_2 = arith.constant 0 : index
    %c0_3 = arith.constant 0 : index
    %c0_4 = arith.constant 0 : index
    %2 = vector.load %arg2[%c0_2, %c0_3, %c0_4] : memref<3x128x128xf32, #tpu.memory_space<vmem>>, vector<1x128x128xf32>
    %3 = vector.shape_cast %2 : vector<1x128x128xf32> to vector<128x128xf32>
    %cst = arith.constant dense<0.000000e+00> : vector<128x128xf32>
    %4 = tpu.matmul %1, %3, %cst {dimension_numbers = #tpu.dot_dimension_numbers<[1], [0], [0], [1], [0, 0, 1, 1], [], []>} : vector<128x128xf32>, vector<128x128xf32>, vector<128x128xf32> -> vector<128x128xf32>
    %c1 = arith.constant 1 : index
    %c0_5 = arith.constant 0 : index
    %c0_6 = arith.constant 0 : index
    %5 = vector.load %arg2[%c1, %c0_5, %c0_6] : memref<3x128x128xf32, #tpu.memory_space<vmem>>, vector<1x128x128xf32>
    %6 = vector.shape_cast %5 : vector<1x128x128xf32> to vector<128x128xf32>
    %cst_7 = arith.constant dense<0.000000e+00> : vector<128x128xf32>
    %7 = tpu.matmul %0, %6, %cst_7 {dimension_numbers = #tpu.dot_dimension_numbers<[1], [0], [0], [1], [0, 0, 1, 1], [], []>} : vector<128x128xf32>, vector<128x128xf32>, vector<128x128xf32> -> vector<128x128xf32>
    %8 = arith.addf %4, %7 : vector<128x128xf32>
    %c16 = arith.constant 16 : index
    %c0_8 = arith.constant 0 : index
    %9 = vector.load %arg1[%c16, %c0_8] : memref<144x128xf32, #tpu.memory_space<vmem>>, vector<128x128xf32>
    %c2 = arith.constant 2 : index
    %c0_9 = arith.constant 0 : index
    %c0_10 = arith.constant 0 : index
    %10 = vector.load %arg2[%c2, %c0_9, %c0_10] : memref<3x128x128xf32, #tpu.memory_space<vmem>>, vector<1x128x128xf32>
    %11 = vector.shape_cast %10 : vector<1x128x128xf32> to vector<128x128xf32>
    %cst_11 = arith.constant dense<0.000000e+00> : vector<128x128xf32>
    %12 = tpu.matmul %9, %11, %cst_11 {dimension_numbers = #tpu.dot_dimension_numbers<[1], [0], [0], [1], [0, 0, 1, 1], [], []>} : vector<128x128xf32>, vector<128x128xf32>, vector<128x128xf32> -> vector<128x128xf32>
    %13 = arith.addf %8, %12 : vector<128x128xf32>
    %c0_12 = arith.constant 0 : index
    %c0_13 = arith.constant 0 : index
    %14 = vector.load %arg3[%c0_12, %c0_13] : memref<1x128xf32, #tpu.memory_space<vmem>>, vector<1x128xf32>
    %15 = vector.broadcast %14 : vector<1x128xf32> to vector<128x128xf32>
    %16 = arith.addf %13, %15 : vector<128x128xf32>
    %cst_14 = arith.constant 0.000000e+00 : f32
    %17 = vector.broadcast %cst_14 : f32 to vector<128x128xf32>
    %18 = arith.maximumf %16, %17 : vector<128x128xf32>
    %19 = tpu.iota {dimensions = array<i32: 0>} : vector<128x128xi32>
    %cst_15 = arith.constant 0.000000e+00 : f32
    %20 = vector.broadcast %cst_15 : f32 to vector<128x128xf32>
    %c8_i32 = arith.constant 8 : i32
    %21 = vector.broadcast %c8_i32 : i32 to vector<128x128xi32>
    %22 = arith.cmpi slt, %19, %21 : vector<128x128xi32>
    %c8_i32_16 = arith.constant 8 : i32
    %23 = tpu.dynamic_rotate %18 by %c8_i32_16 dim 0 : vector<128x128xf32>, i32 -> vector<128x128xf32>
    %24 = arith.select %22, %20, %23 : vector<128x128xi1>, vector<128x128xf32>
    %c120_i32 = arith.constant 120 : i32
    %25 = vector.broadcast %c120_i32 : i32 to vector<128x128xi32>
    %26 = arith.cmpi sge, %19, %25 : vector<128x128xi32>
    %c120_i32_17 = arith.constant 120 : i32
    %27 = tpu.dynamic_rotate %18 by %c120_i32_17 dim 0 : vector<128x128xf32>, i32 -> vector<128x128xf32>
    %28 = arith.select %26, %20, %27 : vector<128x128xi1>, vector<128x128xf32>
    %c0_18 = arith.constant 0 : index
    %c0_19 = arith.constant 0 : index
    %c0_20 = arith.constant 0 : index
    %29 = vector.load %arg4[%c0_18, %c0_19, %c0_20] : memref<3x128x128xf32, #tpu.memory_space<vmem>>, vector<1x128x128xf32>
    %30 = vector.shape_cast %29 : vector<1x128x128xf32> to vector<128x128xf32>
    %cst_21 = arith.constant dense<0.000000e+00> : vector<128x128xf32>
    %31 = tpu.matmul %24, %30, %cst_21 {dimension_numbers = #tpu.dot_dimension_numbers<[1], [0], [0], [1], [0, 0, 1, 1], [], []>} : vector<128x128xf32>, vector<128x128xf32>, vector<128x128xf32> -> vector<128x128xf32>
    %c1_22 = arith.constant 1 : index
    %c0_23 = arith.constant 0 : index
    %c0_24 = arith.constant 0 : index
    %32 = vector.load %arg4[%c1_22, %c0_23, %c0_24] : memref<3x128x128xf32, #tpu.memory_space<vmem>>, vector<1x128x128xf32>
    %33 = vector.shape_cast %32 : vector<1x128x128xf32> to vector<128x128xf32>
    %cst_25 = arith.constant dense<0.000000e+00> : vector<128x128xf32>
    %34 = tpu.matmul %18, %33, %cst_25 {dimension_numbers = #tpu.dot_dimension_numbers<[1], [0], [0], [1], [0, 0, 1, 1], [], []>} : vector<128x128xf32>, vector<128x128xf32>, vector<128x128xf32> -> vector<128x128xf32>
    %35 = arith.addf %31, %34 : vector<128x128xf32>
    %c2_26 = arith.constant 2 : index
    %c0_27 = arith.constant 0 : index
    %c0_28 = arith.constant 0 : index
    %36 = vector.load %arg4[%c2_26, %c0_27, %c0_28] : memref<3x128x128xf32, #tpu.memory_space<vmem>>, vector<1x128x128xf32>
    %37 = vector.shape_cast %36 : vector<1x128x128xf32> to vector<128x128xf32>
    %cst_29 = arith.constant dense<0.000000e+00> : vector<128x128xf32>
    %38 = tpu.matmul %28, %37, %cst_29 {dimension_numbers = #tpu.dot_dimension_numbers<[1], [0], [0], [1], [0, 0, 1, 1], [], []>} : vector<128x128xf32>, vector<128x128xf32>, vector<128x128xf32> -> vector<128x128xf32>
    %39 = arith.addf %35, %38 : vector<128x128xf32>
    %c0_30 = arith.constant 0 : index
    %c0_31 = arith.constant 0 : index
    %40 = vector.load %arg5[%c0_30, %c0_31] : memref<128x128xf32, #tpu.memory_space<vmem>>, vector<128x128xf32>
    %cst_32 = arith.constant dense<0.000000e+00> : vector<128x128xf32>
    %41 = tpu.matmul %0, %40, %cst_32 {dimension_numbers = #tpu.dot_dimension_numbers<[1], [0], [0], [1], [0, 0, 1, 1], [], []>} : vector<128x128xf32>, vector<128x128xf32>, vector<128x128xf32> -> vector<128x128xf32>
    %42 = arith.addf %39, %41 : vector<128x128xf32>
    %c0_33 = arith.constant 0 : index
    %c0_34 = arith.constant 0 : index
    %43 = vector.load %arg6[%c0_33, %c0_34] : memref<1x128xf32, #tpu.memory_space<vmem>>, vector<1x128xf32>
    %44 = vector.broadcast %43 : vector<1x128xf32> to vector<128x128xf32>
    %45 = arith.addf %42, %44 : vector<128x128xf32>
    %cst_35 = arith.constant 0.000000e+00 : f32
    %46 = vector.broadcast %cst_35 : f32 to vector<128x128xf32>
    %47 = arith.maximumf %45, %46 : vector<128x128xf32>
    %c0_36 = arith.constant 0 : index
    %c0_37 = arith.constant 0 : index
    %48 = vector.load %arg7[%c0_36, %c0_37] : memref<128x128xf32, #tpu.memory_space<vmem>>, vector<128x128xf32>
    tpu.vector_store %arg7[%c0_36, %c0_37], %47 {strides = array<i32>} : memref<128x128xf32, #tpu.memory_space<vmem>>, vector<128x128xf32>,
    return
  }
  func.func @transform_0(%arg0: i32) -> (i32, i32) {
    %c0_i32 = arith.constant 0 : i32
    %c0_i32_0 = arith.constant 0 : i32
    return %arg0, %c0_i32 : i32, i32
  }
  func.func @transform_1(%arg0: i32) -> (i32, i32, i32) {
    %c0_i32 = arith.constant 0 : i32
    %c0_i32_0 = arith.constant 0 : i32
    %c0_i32_1 = arith.constant 0 : i32
    %c0_i32_2 = arith.constant 0 : i32
    return %c0_i32, %c0_i32_0, %c0_i32_1 : i32, i32, i32
  }
  func.func @transform_2(%arg0: i32) -> (i32, i32) {
    %c0_i32 = arith.constant 0 : i32
    %c0_i32_0 = arith.constant 0 : i32
    %c0_i32_1 = arith.constant 0 : i32
    return %c0_i32, %c0_i32_0 : i32, i32
  }
  func.func @transform_3(%arg0: i32) -> (i32, i32, i32) {
    %c0_i32 = arith.constant 0 : i32
    %c0_i32_0 = arith.constant 0 : i32
    %c0_i32_1 = arith.constant 0 : i32
    %c0_i32_2 = arith.constant 0 : i32
    return %c0_i32, %c0_i32_0, %c0_i32_1 : i32, i32, i32
  }
  func.func @transform_4(%arg0: i32) -> (i32, i32) {
    %c0_i32 = arith.constant 0 : i32
    %c0_i32_0 = arith.constant 0 : i32
    %c0_i32_1 = arith.constant 0 : i32
    return %c0_i32, %c0_i32_0 : i32, i32
  }
  func.func @transform_5(%arg0: i32) -> (i32, i32) {
    %c0_i32 = arith.constant 0 : i32
    %c0_i32_0 = arith.constant 0 : i32
    %c0_i32_1 = arith.constant 0 : i32
    return %c0_i32, %c0_i32_0 : i32, i32
  }
  func.func @transform_6(%arg0: i32) -> (i32, i32) {
    %c0_i32 = arith.constant 0 : i32
    %c0_i32_0 = arith.constant 0 : i32
    return %arg0, %c0_i32 : i32, i32
  }
}

</mosaic_0001>

<llo_original>
// kernel: tpu_custom_call.1
$region0: #{tpu_custom_call.1}
  #allocation0 [shape = 'u32[]', space=smem, size = 0x4, offset = 0x4, fixed_abs, tag = 'smem constant byte address 0x4 - core index']
  #allocation1 [shape = 'u32[72,128]{1,0:T(1,128)}', space=vmem, size = 0x9000, scoped, tag = 'internal scratch']
  %s0 = inlined_call_operand.hbm [shape: f32[144,128], index: 0, kind: input, shape index: {}]
  %s1 = inlined_call_operand.hbm [shape: f32[3,128,128], index: 1, kind: input, shape index: {}]
  %s2 = inlined_call_operand.vmem [shape: f32[1,128], index: 2, kind: input, shape index: {}]
  %s3 = inlined_call_operand.hbm [shape: f32[3,128,128], index: 3, kind: input, shape index: {}]
  %s4 = inlined_call_operand.hbm [shape: f32[128,128], index: 4, kind: input, shape index: {}]
  %s5 = inlined_call_operand.vmem [shape: f32[1,128], index: 5, kind: input, shape index: {}]
  %s6 = inlined_call_operand.hbm [shape: f32[128,128], index: 6, kind: output, shape index: {}]
  %s7 = sld [smem:[#allocation0]]
  $region50: #{tpu_custom_call.1} parent=0
    _
  %s9 = ssub.s32 1, %s7
  %s10 = scalar_select 0, %s9, %s7
  $region1: #{tpu_custom_call.1} parent=0
    #allocation2 [shape = 'u8[73728]{0}', space=vmem, size = 0x12000, scoped, tag = 'input window, operand 0, single buffered']
    #allocation3 [shape = 's32[1]{0}', space=sflag, size = 0x4, scoped, tag = 'scoped memory for tpu_custom_call.1']
    #allocation4 [shape = 's32[1]{0}', space=sflag, size = 0x4, scoped, tag = 'scoped memory for tpu_custom_call.1']
    #allocation5 [shape = 'u8[196608]{0}', space=vmem, size = 0x30000, scoped, tag = 'input window, operand 1, single buffered']
    #allocation6 [shape = 's32[1]{0}', space=sflag, size = 0x4, scoped, tag = 'scoped memory for tpu_custom_call.1']
    #allocation7 [shape = 'u8[196608]{0}', space=vmem, size = 0x30000, scoped, tag = 'input window, operand 3, single buffered']
    #allocation8 [shape = 'u8[65536]{0}', space=vmem, size = 0x10000, scoped, tag = 'input window, operand 4, single buffered']
    #allocation9 [shape = 's32[1]{0}', space=sflag, size = 0x4, scoped, tag = 'scoped memory for tpu_custom_call.1']
    #allocation10 [shape = 'u8[65536]{0}', space=vmem, size = 0x10000, scoped, tag = 'output window, operand 0, single buffered']
    %11 = vsyncpa [#allocation3], 0
    %12 = vsyncpa [#allocation6], 0
    %13 = vsyncpa [#allocation9], 0
    %14 = vsyncpa [#allocation4], 0
    // Predicated region
    $region2: #{tpu_custom_call.1} parent=1 // pred_check
      _
    $region3: #{tpu_custom_call.1} parent=1 // pred_check_branch
      %16 = sbr.rel (0) target = $region5
    $region4: #{tpu_custom_call.1} parent=1 // pred_region
      %18 = vsyncadd [#allocation3], 0
      %s19 = sshll.u32 %s0, 4
      %s20 = int_to_ptr.hbm [resolvable:$true] %s19
      %s21 = sshll.u32 [#allocation2], 4
      %s22 = int_to_ptr.vmem [resolvable:$true] %s21
      %27 = dma.hbm_to_vmem [thread:$0]  %s20, 2304, %s22, [#allocation3], 128, 128, 8
    $region5: #{tpu_custom_call.1} parent=1 // pred_fallthru
      _
    // Predicated region
    $region6: #{tpu_custom_call.1} parent=1 // pred_check
      _
    $region7: #{tpu_custom_call.1} parent=1 // pred_check_branch
      %29 = sbr.rel (0) target = $region9
    $region8: #{tpu_custom_call.1} parent=1 // pred_region
      %31 = vsyncadd [#allocation6], 0
      %s32 = sshll.u32 %s1, 4
      %s33 = int_to_ptr.hbm [resolvable:$true] %s32
      %s34 = sshll.u32 [#allocation5], 4
      %s35 = int_to_ptr.vmem [resolvable:$true] %s34
      %40 = dma.hbm_to_vmem [thread:$0]  %s33, 6144, %s35, [#allocation6], 128, 128, 8
    $region9: #{tpu_custom_call.1} parent=1 // pred_fallthru
      _
    // Predicated region
    $region10: #{tpu_custom_call.1} parent=1 // pred_check
      _
    $region11: #{tpu_custom_call.1} parent=1 // pred_check_branch
      %42 = sbr.rel (0) target = $region13
    $region12: #{tpu_custom_call.1} parent=1 // pred_region
      _
    $region13: #{tpu_custom_call.1} parent=1 // pred_fallthru
      _
    // Predicated region
    $region14: #{tpu_custom_call.1} parent=1 // pred_check
      _
    $region15: #{tpu_custom_call.1} parent=1 // pred_check_branch
      %44 = sbr.rel (0) target = $region17
    $region16: #{tpu_custom_call.1} parent=1 // pred_region
      %46 = vsyncadd [#allocation6], 0
      %s47 = sshll.u32 %s3, 4
      %s48 = int_to_ptr.hbm [resolvable:$true] %s47
      %s49 = sshll.u32 [#allocation7], 4
      %s50 = int_to_ptr.vmem [resolvable:$true] %s49
      %55 = dma.hbm_to_vmem [thread:$0]  %s48, 6144, %s50, [#allocation6], 128, 128, 8
    $region17: #{tpu_custom_call.1} parent=1 // pred_fallthru
      _
    // Predicated region
    $region18: #{tpu_custom_call.1} parent=1 // pred_check
      _
    $region19: #{tpu_custom_call.1} parent=1 // pred_check_branch
      %57 = sbr.rel (0) target = $region21
    $region20: #{tpu_custom_call.1} parent=1 // pred_region
      %59 = vsyncadd [#allocation9], 0
      %s60 = sshll.u32 %s4, 4
      %s61 = int_to_ptr.hbm [resolvable:$true] %s60
      %s62 = sshll.u32 [#allocation8], 4
      %s63 = int_to_ptr.vmem [resolvable:$true] %s62
      %68 = dma.hbm_to_vmem [thread:$0]  %s61, 2048, %s63, [#allocation9], 128, 128, 8
    $region21: #{tpu_custom_call.1} parent=1 // pred_fallthru
      _
    // Predicated region
    $region22: #{tpu_custom_call.1} parent=1 // pred_check
      _
    $region23: #{tpu_custom_call.1} parent=1 // pred_check_branch
      %70 = sbr.rel (0) target = $region25
    $region24: #{tpu_custom_call.1} parent=1 // pred_region
      _
    $region25: #{tpu_custom_call.1} parent=1 // pred_fallthru
      _
    // Predicated region
    $region26: #{tpu_custom_call.1} parent=1 // pred_check
      _
    $region27: #{tpu_custom_call.1} parent=1 // pred_check_branch
      %72 = sbr.rel (0) target = $region29
    $region28: #{tpu_custom_call.1} parent=1 // pred_region
      %74 = dma.done [#allocation3], 2304
    $region29: #{tpu_custom_call.1} parent=1 // pred_fallthru
      _
    // Predicated region
    $region30: #{tpu_custom_call.1} parent=1 // pred_check
      _
    $region31: #{tpu_custom_call.1} parent=1 // pred_check_branch
      %76 = sbr.rel (0) target = $region33
    $region32: #{tpu_custom_call.1} parent=1 // pred_region
      %78 = dma.done [#allocation6], 6144
    $region33: #{tpu_custom_call.1} parent=1 // pred_fallthru
      _
    // Predicated region
    $region34: #{tpu_custom_call.1} parent=1 // pred_check
      _
    $region35: #{tpu_custom_call.1} parent=1 // pred_check_branch
      %80 = sbr.rel (0) target = $region37
    $region36: #{tpu_custom_call.1} parent=1 // pred_region
      %82 = dma.done [#allocation6], 6144
    $region37: #{tpu_custom_call.1} parent=1 // pred_fallthru
      _
    // Predicated region
    $region38: #{tpu_custom_call.1} parent=1 // pred_check
      _
    $region39: #{tpu_custom_call.1} parent=1 // pred_check_branch
      %84 = sbr.rel (0) target = $region41
    $region40: #{tpu_custom_call.1} parent=1 // pred_region
      %86 = dma.done [#allocation9], 2048
    $region41: #{tpu_custom_call.1} parent=1 // pred_fallthru
      _
    %v87 = vld [vmem:[#allocation2 + $0x8] sm:$0xff]
    %v88 = vld [vmem:[#allocation2 + $0x10] sm:$0xff]
    %v89 = vld [vmem:[#allocation2 + $0x18] sm:$0xff]
    %v90 = vld [vmem:[#allocation2 + $0x20] sm:$0xff]
    %v91 = vld [vmem:[#allocation2 + $0x28] sm:$0xff]
    %v92 = vld [vmem:[#allocation2 + $0x30] sm:$0xff]
    %v93 = vld [vmem:[#allocation2 + $0x38] sm:$0xff]
    %v94 = vld [vmem:[#allocation2 + $0x40] sm:$0xff]
    %v95 = vld [vmem:[#allocation2 + $0x48] sm:$0xff]
    %v96 = vld [vmem:[#allocation2 + $0x50] sm:$0xff]
    %v97 = vld [vmem:[#allocation2 + $0x58] sm:$0xff]
    %v98 = vld [vmem:[#allocation2 + $0x60] sm:$0xff]
    %v99 = vld [vmem:[#allocation2 + $0x68] sm:$0xff]
    %v100 = vld [vmem:[#allocation2 + $0x70] sm:$0xff]
    %v101 = vld [vmem:[#allocation2 + $0x78] sm:$0xff]
    %v102 = vld [vmem:[#allocation2 + $0x80] sm:$0xff]
    %v103 = vld [vmem:[#allocation2] sm:$0xff]
    %v104 = vld [vmem:[#allocation5] sm:$0xff]
    %v105 = vld [vmem:[#allocation5 + $0x8] sm:$0xff]
    %v106 = vld [vmem:[#allocation5 + $0x10] sm:$0xff]
    %v107 = vld [vmem:[#allocation5 + $0x18] sm:$0xff]
    %v108 = vld [vmem:[#allocation5 + $0x20] sm:$0xff]
    %v109 = vld [vmem:[#allocation5 + $0x28] sm:$0xff]
    %v110 = vld [vmem:[#allocation5 + $0x30] sm:$0xff]
    %v111 = vld [vmem:[#allocation5 + $0x38] sm:$0xff]
    %v112 = vld [vmem:[#allocation5 + $0x40] sm:$0xff]
    %v113 = vld [vmem:[#allocation5 + $0x48] sm:$0xff]
    %v114 = vld [vmem:[#allocation5 + $0x50] sm:$0xff]
    %v115 = vld [vmem:[#allocation5 + $0x58] sm:$0xff]
    %v116 = vld [vmem:[#allocation5 + $0x60] sm:$0xff]
    %v117 = vld [vmem:[#allocation5 + $0x68] sm:$0xff]
    %v118 = vld [vmem:[#allocation5 + $0x70] sm:$0xff]
    %v119 = vld [vmem:[#allocation5 + $0x78] sm:$0xff]
    %s120 = scalar_lea.vmem [#allocation5], 128
    %v121 = vld [vmem:[%s120] sm:$0xff]
    %v122 = vld [vmem:[%s120 + $0x8] sm:$0xff]
    %v123 = vld [vmem:[%s120 + $0x10] sm:$0xff]
    %v124 = vld [vmem:[%s120 + $0x18] sm:$0xff]
    %v125 = vld [vmem:[%s120 + $0x20] sm:$0xff]
    %v126 = vld [vmem:[%s120 + $0x28] sm:$0xff]
    %v127 = vld [vmem:[%s120 + $0x30] sm:$0xff]
    %v128 = vld [vmem:[%s120 + $0x38] sm:$0xff]
    %v129 = vld [vmem:[%s120 + $0x40] sm:$0xff]
    %v130 = vld [vmem:[%s120 + $0x48] sm:$0xff]
    %v131 = vld [vmem:[%s120 + $0x50] sm:$0xff]
    %v132 = vld [vmem:[%s120 + $0x58] sm:$0xff]
    %v133 = vld [vmem:[%s120 + $0x60] sm:$0xff]
    %v134 = vld [vmem:[%s120 + $0x68] sm:$0xff]
    %v135 = vld [vmem:[%s120 + $0x70] sm:$0xff]
    %v136 = vld [vmem:[%s120 + $0x78] sm:$0xff]
    %137 = vmatpush.msra.mxu0 %v136
    %138 = vmatpush.msra.mxu0 %v135
    %139 = vmatpush.msra.mxu0 %v134
    %140 = vmatpush.msra.mxu0 %v133
    %141 = vmatpush.msra.mxu0 %v132
    %142 = vmatpush.msra.mxu0 %v131
    %143 = vmatpush.msra.mxu0 %v130
    %144 = vmatpush.msra.mxu0 %v129
    %145 = vmatpush.msra.mxu0 %v128
    %146 = vmatpush.msra.mxu0 %v127
    %147 = vmatpush.msra.mxu0 %v126
    %148 = vmatpush.msra.mxu0 %v125
    %149 = vmatpush.msra.mxu0 %v124
    %150 = vmatpush.msra.mxu0 %v123
    %151 = vmatpush.msra.mxu0 %v122
    %152 = vmatpush.msra.mxu0 %v121
    %153 = vmatmul.f32.gmra.mxu0 %v87
    %v154 = vpop.f32.mrf.mxu0
    %v155 = vadd.f32 0.0, %v154
    %156 = vmatmul.f32.gmra.mxu0 %v88
    %v157 = vpop.f32.mrf.mxu0
    %v158 = vadd.f32 0.0, %v157
    %159 = vmatmul.f32.gmra.mxu0 %v89
    %v160 = vpop.f32.mrf.mxu0
    %v161 = vadd.f32 0.0, %v160
    %162 = vmatmul.f32.gmra.mxu0 %v90
    %v163 = vpop.f32.mrf.mxu0
    %v164 = vadd.f32 0.0, %v163
    %165 = vmatmul.f32.gmra.mxu0 %v91
    %v166 = vpop.f32.mrf.mxu0
    %v167 = vadd.f32 0.0, %v166
    %168 = vmatmul.f32.gmra.mxu0 %v92
    %v169 = vpop.f32.mrf.mxu0
    %v170 = vadd.f32 0.0, %v169
    %171 = vmatmul.f32.gmra.mxu0 %v93
    %v172 = vpop.f32.mrf.mxu0
    %v173 = vadd.f32 0.0, %v172
    %174 = vmatmul.f32.gmra.mxu0 %v94
    %v175 = vpop.f32.mrf.mxu0
    %v176 = vadd.f32 0.0, %v175
    %177 = vmatmul.f32.gmra.mxu0 %v95
    %v178 = vpop.f32.mrf.mxu0
    %v179 = vadd.f32 0.0, %v178
    %180 = vmatmul.f32.gmra.mxu0 %v96
    %v181 = vpop.f32.mrf.mxu0
    %v182 = vadd.f32 0.0, %v181
    %183 = vmatmul.f32.gmra.mxu0 %v97
    %v184 = vpop.f32.mrf.mxu0
    %v185 = vadd.f32 0.0, %v184
    %186 = vmatmul.f32.gmra.mxu0 %v98
    %v187 = vpop.f32.mrf.mxu0
    %v188 = vadd.f32 0.0, %v187
    %189 = vmatmul.f32.gmra.mxu0 %v99
    %v190 = vpop.f32.mrf.mxu0
    %v191 = vadd.f32 0.0, %v190
    %192 = vmatmul.f32.gmra.mxu0 %v100
    %v193 = vpop.f32.mrf.mxu0
    %v194 = vadd.f32 0.0, %v193
    %195 = vmatmul.f32.gmra.mxu0 %v101
    %v196 = vpop.f32.mrf.mxu0
    %v197 = vadd.f32 0.0, %v196
    %198 = vmatmul.f32.gmra.mxu0 %v102
    %v199 = vpop.f32.mrf.mxu0
    %v200 = vadd.f32 0.0, %v199
    %201 = vdwg.mxu0
    %202 = vmatpush.msra.mxu0 %v119
    %203 = vmatpush.msra.mxu0 %v118
    %204 = vmatpush.msra.mxu0 %v117
    %205 = vmatpush.msra.mxu0 %v116
    %206 = vmatpush.msra.mxu0 %v115
    %207 = vmatpush.msra.mxu0 %v114
    %208 = vmatpush.msra.mxu0 %v113
    %209 = vmatpush.msra.mxu0 %v112
    %210 = vmatpush.msra.mxu0 %v111
    %211 = vmatpush.msra.mxu0 %v110
    %212 = vmatpush.msra.mxu0 %v109
    %213 = vmatpush.msra.mxu0 %v108
    %214 = vmatpush.msra.mxu0 %v107
    %215 = vmatpush.msra.mxu0 %v106
    %216 = vmatpush.msra.mxu0 %v105
    %217 = vmatpush.msra.mxu0 %v104
    %218 = vmatmul.f32.gmra.mxu0 %v103
    %v219 = vpop.f32.mrf.mxu0
    %v220 = vadd.f32 %v155, %v219
    %221 = vmatmul.f32.gmra.mxu0 %v87
    %v222 = vpop.f32.mrf.mxu0
    %v223 = vadd.f32 %v158, %v222
    %224 = vmatmul.f32.gmra.mxu0 %v88
    %v225 = vpop.f32.mrf.mxu0
    %v226 = vadd.f32 %v161, %v225
    %227 = vmatmul.f32.gmra.mxu0 %v89
    %v228 = vpop.f32.mrf.mxu0
    %v229 = vadd.f32 %v164, %v228
    %230 = vmatmul.f32.gmra.mxu0 %v90
    %v231 = vpop.f32.mrf.mxu0
    %v232 = vadd.f32 %v167, %v231
    %233 = vmatmul.f32.gmra.mxu0 %v91
    %v234 = vpop.f32.mrf.mxu0
    %v235 = vadd.f32 %v170, %v234
    %236 = vmatmul.f32.gmra.mxu0 %v92
    %v237 = vpop.f32.mrf.mxu0
    %v238 = vadd.f32 %v173, %v237
    %239 = vmatmul.f32.gmra.mxu0 %v93
    %v240 = vpop.f32.mrf.mxu0
    %v241 = vadd.f32 %v176, %v240
    %242 = vmatmul.f32.gmra.mxu0 %v94
    %v243 = vpop.f32.mrf.mxu0
    %v244 = vadd.f32 %v179, %v243
    %245 = vmatmul.f32.gmra.mxu0 %v95
    %v246 = vpop.f32.mrf.mxu0
    %v247 = vadd.f32 %v182, %v246
    %248 = vmatmul.f32.gmra.mxu0 %v96
    %v249 = vpop.f32.mrf.mxu0
    %v250 = vadd.f32 %v185, %v249
    %251 = vmatmul.f32.gmra.mxu0 %v97
    %v252 = vpop.f32.mrf.mxu0
    %v253 = vadd.f32 %v188, %v252
    %254 = vmatmul.f32.gmra.mxu0 %v98
    %v255 = vpop.f32.mrf.mxu0
    %v256 = vadd.f32 %v191, %v255
    %257 = vmatmul.f32.gmra.mxu0 %v99
    %v258 = vpop.f32.mrf.mxu0
    %v259 = vadd.f32 %v194, %v258
    %260 = vmatmul.f32.gmra.mxu0 %v100
    %v261 = vpop.f32.mrf.mxu0
    %v262 = vadd.f32 %v197, %v261
    %263 = vmatmul.f32.gmra.mxu0 %v101
    %v264 = vpop.f32.mrf.mxu0
    %v265 = vadd.f32 %v200, %v264
    %266 = vdwg.mxu0
    %v267 = vld [vmem:[#allocation2 + $0x10] sm:$0xff]
    %v268 = vld [vmem:[#allocation2 + $0x18] sm:$0xff]
    %v269 = vld [vmem:[#allocation2 + $0x20] sm:$0xff]
    %v270 = vld [vmem:[#allocation2 + $0x28] sm:$0xff]
    %v271 = vld [vmem:[#allocation2 + $0x30] sm:$0xff]
    %v272 = vld [vmem:[#allocation2 + $0x38] sm:$0xff]
    %v273 = vld [vmem:[#allocation2 + $0x40] sm:$0xff]
    %v274 = vld [vmem:[#allocation2 + $0x48] sm:$0xff]
    %v275 = vld [vmem:[#allocation2 + $0x50] sm:$0xff]
    %v276 = vld [vmem:[#allocation2 + $0x58] sm:$0xff]
    %v277 = vld [vmem:[#allocation2 + $0x60] sm:$0xff]
    %v278 = vld [vmem:[#allocation2 + $0x68] sm:$0xff]
    %v279 = vld [vmem:[#allocation2 + $0x70] sm:$0xff]
    %v280 = vld [vmem:[#allocation2 + $0x78] sm:$0xff]
    %v281 = vld [vmem:[#allocation2 + $0x80] sm:$0xff]
    %v282 = vld [vmem:[#allocation2 + $0x88] sm:$0xff]
    %s283 = scalar_lea.vmem [#allocation5], 256
    %v284 = vld [vmem:[%s283] sm:$0xff]
    %v285 = vld [vmem:[%s283 + $0x8] sm:$0xff]
    %v286 = vld [vmem:[%s283 + $0x10] sm:$0xff]
    %v287 = vld [vmem:[%s283 + $0x18] sm:$0xff]
    %v288 = vld [vmem:[%s283 + $0x20] sm:$0xff]
    %v289 = vld [vmem:[%s283 + $0x28] sm:$0xff]
    %v290 = vld [vmem:[%s283 + $0x30] sm:$0xff]
    %v291 = vld [vmem:[%s283 + $0x38] sm:$0xff]
    %v292 = vld [vmem:[%s283 + $0x40] sm:$0xff]
    %v293 = vld [vmem:[%s283 + $0x48] sm:$0xff]
    %v294 = vld [vmem:[%s283 + $0x50] sm:$0xff]
    %v295 = vld [vmem:[%s283 + $0x58] sm:$0xff]
    %v296 = vld [vmem:[%s283 + $0x60] sm:$0xff]
    %v297 = vld [vmem:[%s283 + $0x68] sm:$0xff]
    %v298 = vld [vmem:[%s283 + $0x70] sm:$0xff]
    %v299 = vld [vmem:[%s283 + $0x78] sm:$0xff]
    %300 = vmatpush.msra.mxu0 %v299
    %301 = vmatpush.msra.mxu0 %v298
    %302 = vmatpush.msra.mxu0 %v297
    %303 = vmatpush.msra.mxu0 %v296
    %304 = vmatpush.msra.mxu0 %v295
    %305 = vmatpush.msra.mxu0 %v294
    %306 = vmatpush.msra.mxu0 %v293
    %307 = vmatpush.msra.mxu0 %v292
    %308 = vmatpush.msra.mxu0 %v291
    %309 = vmatpush.msra.mxu0 %v290
    %310 = vmatpush.msra.mxu0 %v289
    %311 = vmatpush.msra.mxu0 %v288
    %312 = vmatpush.msra.mxu0 %v287
    %313 = vmatpush.msra.mxu0 %v286
    %314 = vmatpush.msra.mxu0 %v285
    %315 = vmatpush.msra.mxu0 %v284
    %316 = vmatmul.f32.gmra.mxu0 %v267
    %v317 = vpop.f32.mrf.mxu0
    %v318 = vadd.f32 0.0, %v317
    %319 = vmatmul.f32.gmra.mxu0 %v268
    %v320 = vpop.f32.mrf.mxu0
    %v321 = vadd.f32 0.0, %v320
    %322 = vmatmul.f32.gmra.mxu0 %v269
    %v323 = vpop.f32.mrf.mxu0
    %v324 = vadd.f32 0.0, %v323
    %325 = vmatmul.f32.gmra.mxu0 %v270
    %v326 = vpop.f32.mrf.mxu0
    %v327 = vadd.f32 0.0, %v326
    %328 = vmatmul.f32.gmra.mxu0 %v271
    %v329 = vpop.f32.mrf.mxu0
    %v330 = vadd.f32 0.0, %v329
    %331 = vmatmul.f32.gmra.mxu0 %v272
    %v332 = vpop.f32.mrf.mxu0
    %v333 = vadd.f32 0.0, %v332
    %334 = vmatmul.f32.gmra.mxu0 %v273
    %v335 = vpop.f32.mrf.mxu0
    %v336 = vadd.f32 0.0, %v335
    %337 = vmatmul.f32.gmra.mxu0 %v274
    %v338 = vpop.f32.mrf.mxu0
    %v339 = vadd.f32 0.0, %v338
    %340 = vmatmul.f32.gmra.mxu0 %v275
    %v341 = vpop.f32.mrf.mxu0
    %v342 = vadd.f32 0.0, %v341
    %343 = vmatmul.f32.gmra.mxu0 %v276
    %v344 = vpop.f32.mrf.mxu0
    %v345 = vadd.f32 0.0, %v344
    %346 = vmatmul.f32.gmra.mxu0 %v277
    %v347 = vpop.f32.mrf.mxu0
    %v348 = vadd.f32 0.0, %v347
    %349 = vmatmul.f32.gmra.mxu0 %v278
    %v350 = vpop.f32.mrf.mxu0
    %v351 = vadd.f32 0.0, %v350
    %352 = vmatmul.f32.gmra.mxu0 %v279
    %v353 = vpop.f32.mrf.mxu0
    %v354 = vadd.f32 0.0, %v353
    %355 = vmatmul.f32.gmra.mxu0 %v280
    %v356 = vpop.f32.mrf.mxu0
    %v357 = vadd.f32 0.0, %v356
    %358 = vmatmul.f32.gmra.mxu0 %v281
    %v359 = vpop.f32.mrf.mxu0
    %v360 = vadd.f32 0.0, %v359
    %361 = vmatmul.f32.gmra.mxu0 %v282
    %v362 = vpop.f32.mrf.mxu0
    %v363 = vadd.f32 0.0, %v362
    %364 = vdwg.mxu0
    %v365 = vadd.f32 %v220, %v318
    %v366 = vadd.f32 %v223, %v321
    %v367 = vadd.f32 %v226, %v324
    %v368 = vadd.f32 %v229, %v327
    %v369 = vadd.f32 %v232, %v330
    %v370 = vadd.f32 %v235, %v333
    %v371 = vadd.f32 %v238, %v336
    %v372 = vadd.f32 %v241, %v339
    %v373 = vadd.f32 %v244, %v342
    %v374 = vadd.f32 %v247, %v345
    %v375 = vadd.f32 %v250, %v348
    %v376 = vadd.f32 %v253, %v351
    %v377 = vadd.f32 %v256, %v354
    %v378 = vadd.f32 %v259, %v357
    %v379 = vadd.f32 %v262, %v360
    %v380 = vadd.f32 %v265, %v363
    %v381 = vld [vmem:[%s2] sm:$0x1]
    %v383 = vperm.slane %v381, 0
    %v385 = vadd.f32 %v365, %v383
    %v386 = vadd.f32 %v366, %v383
    %v387 = vadd.f32 %v367, %v383
    %v388 = vadd.f32 %v368, %v383
    %v389 = vadd.f32 %v369, %v383
    %v390 = vadd.f32 %v370, %v383
    %v391 = vadd.f32 %v371, %v383
    %v392 = vadd.f32 %v372, %v383
    %v393 = vadd.f32 %v373, %v383
    %v394 = vadd.f32 %v374, %v383
    %v395 = vadd.f32 %v375, %v383
    %v396 = vadd.f32 %v376, %v383
    %v397 = vadd.f32 %v377, %v383
    %v398 = vadd.f32 %v378, %v383
    %v399 = vadd.f32 %v379, %v383
    %v400 = vadd.f32 %v380, %v383
    %v401 = vmax.f32 %v385, 0.0
    %v402 = vmax.f32 %v386, 0.0
    %v403 = vmax.f32 %v387, 0.0
    %v404 = vmax.f32 %v388, 0.0
    %v405 = vmax.f32 %v389, 0.0
    %v406 = vmax.f32 %v390, 0.0
    %v407 = vmax.f32 %v391, 0.0
    %v408 = vmax.f32 %v392, 0.0
    %v409 = vmax.f32 %v393, 0.0
    %v410 = vmax.f32 %v394, 0.0
    %v411 = vmax.f32 %v395, 0.0
    %v412 = vmax.f32 %v396, 0.0
    %v413 = vmax.f32 %v397, 0.0
    %v414 = vmax.f32 %v398, 0.0
    %v415 = vmax.f32 %v399, 0.0
    %v416 = vmax.f32 %v400, 0.0
    %v417 = vlaneseq
    %v418 = vshrl.u32 %v417, 7
    %v419 = vadd.s32 %v418, 8
    %v420 = vadd.s32 %v418, 16
    %v421 = vadd.s32 %v418, 24
    %v422 = vadd.s32 %v418, 32
    %v423 = vadd.s32 %v418, 40
    %v424 = vadd.s32 %v418, 48
    %v425 = vadd.s32 %v418, 56
    %v426 = vadd.s32 %v418, 64
    %v427 = vadd.s32 %v418, 72
    %v428 = vadd.s32 %v418, 80
    %v429 = vadd.s32 %v418, 88
    %v430 = vadd.s32 %v418, 96
    %v431 = vadd.s32 %v418, 104
    %v432 = vadd.s32 %v418, 112
    %v433 = vadd.s32 %v418, 120
    %vm434 = vcmp.lt.s32.totalorder %v418, 8
    %vm435 = vcmp.lt.s32.totalorder %v419, 8
    %vm436 = vcmp.lt.s32.totalorder %v420, 8
    %vm437 = vcmp.lt.s32.totalorder %v421, 8
    %vm438 = vcmp.lt.s32.totalorder %v422, 8
    %vm439 = vcmp.lt.s32.totalorder %v423, 8
    %vm440 = vcmp.lt.s32.totalorder %v424, 8
    %vm441 = vcmp.lt.s32.totalorder %v425, 8
    %vm442 = vcmp.lt.s32.totalorder %v426, 8
    %vm443 = vcmp.lt.s32.totalorder %v427, 8
    %vm444 = vcmp.lt.s32.totalorder %v428, 8
    %vm445 = vcmp.lt.s32.totalorder %v429, 8
    %vm446 = vcmp.lt.s32.totalorder %v430, 8
    %vm447 = vcmp.lt.s32.totalorder %v431, 8
    %vm448 = vcmp.lt.s32.totalorder %v432, 8
    %vm449 = vcmp.lt.s32.totalorder %v433, 8
    %v450 = vsel %vm434, 0.0, %v416
    %v451 = vsel %vm435, 0.0, %v401
    %v452 = vsel %vm436, 0.0, %v402
    %v453 = vsel %vm437, 0.0, %v403
    %v454 = vsel %vm438, 0.0, %v404
    %v455 = vsel %vm439, 0.0, %v405
    %v456 = vsel %vm440, 0.0, %v406
    %v457 = vsel %vm441, 0.0, %v407
    %v458 = vsel %vm442, 0.0, %v408
    %v459 = vsel %vm443, 0.0, %v409
    %v460 = vsel %vm444, 0.0, %v410
    %v461 = vsel %vm445, 0.0, %v411
    %v462 = vsel %vm446, 0.0, %v412
    %v463 = vsel %vm447, 0.0, %v413
    %v464 = vsel %vm448, 0.0, %v414
    %v465 = vsel %vm449, 0.0, %v415
    %vm466 = vcmp.ge.s32.totalorder %v418, 120
    %vm467 = vcmp.ge.s32.totalorder %v419, 120
    %vm468 = vcmp.ge.s32.totalorder %v420, 120
    %vm469 = vcmp.ge.s32.totalorder %v421, 120
    %vm470 = vcmp.ge.s32.totalorder %v422, 120
    %vm471 = vcmp.ge.s32.totalorder %v423, 120
    %vm472 = vcmp.ge.s32.totalorder %v424, 120
    %vm473 = vcmp.ge.s32.totalorder %v425, 120
    %vm474 = vcmp.ge.s32.totalorder %v426, 120
    %vm475 = vcmp.ge.s32.totalorder %v427, 120
    %vm476 = vcmp.ge.s32.totalorder %v428, 120
    %vm477 = vcmp.ge.s32.totalorder %v429, 120
    %vm478 = vcmp.ge.s32.totalorder %v430, 120
    %vm479 = vcmp.ge.s32.totalorder %v431, 120
    %vm480 = vcmp.ge.s32.totalorder %v432, 120
    %vm481 = vcmp.ge.s32.totalorder %v433, 120
    %v482 = vsel %vm466, 0.0, %v402
    %v483 = vsel %vm467, 0.0, %v403
    %v484 = vsel %vm468, 0.0, %v404
    %v485 = vsel %vm469, 0.0, %v405
    %v486 = vsel %vm470, 0.0, %v406
    %v487 = vsel %vm471, 0.0, %v407
    %v488 = vsel %vm472, 0.0, %v408
    %v489 = vsel %vm473, 0.0, %v409
    %v490 = vsel %vm474, 0.0, %v410
    %v491 = vsel %vm475, 0.0, %v411
    %v492 = vsel %vm476, 0.0, %v412
    %v493 = vsel %vm477, 0.0, %v413
    %v494 = vsel %vm478, 0.0, %v414
    %v495 = vsel %vm479, 0.0, %v415
    %v496 = vsel %vm480, 0.0, %v416
    %v497 = vsel %vm481, 0.0, %v401
    %v498 = vld [vmem:[#allocation7] sm:$0xff]
    %v499 = vld [vmem:[#allocation7 + $0x8] sm:$0xff]
    %v500 = vld [vmem:[#allocation7 + $0x10] sm:$0xff]
    %v501 = vld [vmem:[#allocation7 + $0x18] sm:$0xff]
    %v502 = vld [vmem:[#allocation7 + $0x20] sm:$0xff]
    %v503 = vld [vmem:[#allocation7 + $0x28] sm:$0xff]
    %v504 = vld [vmem:[#allocation7 + $0x30] sm:$0xff]
    %v505 = vld [vmem:[#allocation7 + $0x38] sm:$0xff]
    %v506 = vld [vmem:[#allocation7 + $0x40] sm:$0xff]
    %v507 = vld [vmem:[#allocation7 + $0x48] sm:$0xff]
    %v508 = vld [vmem:[#allocation7 + $0x50] sm:$0xff]
    %v509 = vld [vmem:[#allocation7 + $0x58] sm:$0xff]
    %v510 = vld [vmem:[#allocation7 + $0x60] sm:$0xff]
    %v511 = vld [vmem:[#allocation7 + $0x68] sm:$0xff]
    %v512 = vld [vmem:[#allocation7 + $0x70] sm:$0xff]
    %v513 = vld [vmem:[#allocation7 + $0x78] sm:$0xff]
    %s514 = scalar_lea.vmem [#allocation7], 128
    %v515 = vld [vmem:[%s514] sm:$0xff]
    %v516 = vld [vmem:[%s514 + $0x8] sm:$0xff]
    %v517 = vld [vmem:[%s514 + $0x10] sm:$0xff]
    %v518 = vld [vmem:[%s514 + $0x18] sm:$0xff]
    %v519 = vld [vmem:[%s514 + $0x20] sm:$0xff]
    %v520 = vld [vmem:[%s514 + $0x28] sm:$0xff]
    %v521 = vld [vmem:[%s514 + $0x30] sm:$0xff]
    %v522 = vld [vmem:[%s514 + $0x38] sm:$0xff]
    %v523 = vld [vmem:[%s514 + $0x40] sm:$0xff]
    %v524 = vld [vmem:[%s514 + $0x48] sm:$0xff]
    %v525 = vld [vmem:[%s514 + $0x50] sm:$0xff]
    %v526 = vld [vmem:[%s514 + $0x58] sm:$0xff]
    %v527 = vld [vmem:[%s514 + $0x60] sm:$0xff]
    %v528 = vld [vmem:[%s514 + $0x68] sm:$0xff]
    %v529 = vld [vmem:[%s514 + $0x70] sm:$0xff]
    %v530 = vld [vmem:[%s514 + $0x78] sm:$0xff]
    %531 = vmatpush.msra.mxu0 %v530
    %532 = vmatpush.msra.mxu0 %v529
    %533 = vmatpush.msra.mxu0 %v528
    %534 = vmatpush.msra.mxu0 %v527
    %535 = vmatpush.msra.mxu0 %v526
    %536 = vmatpush.msra.mxu0 %v525
    %537 = vmatpush.msra.mxu0 %v524
    %538 = vmatpush.msra.mxu0 %v523
    %539 = vmatpush.msra.mxu0 %v522
    %540 = vmatpush.msra.mxu0 %v521
    %541 = vmatpush.msra.mxu0 %v520
    %542 = vmatpush.msra.mxu0 %v519
    %543 = vmatpush.msra.mxu0 %v518
    %544 = vmatpush.msra.mxu0 %v517
    %545 = vmatpush.msra.mxu0 %v516
    %546 = vmatpush.msra.mxu0 %v515
    %547 = vmatmul.f32.gmra.mxu0 %v401
    %v548 = vpop.f32.mrf.mxu0
    %v549 = vadd.f32 0.0, %v548
    %550 = vmatmul.f32.gmra.mxu0 %v402
    %v551 = vpop.f32.mrf.mxu0
    %v552 = vadd.f32 0.0, %v551
    %553 = vmatmul.f32.gmra.mxu0 %v403
    %v554 = vpop.f32.mrf.mxu0
    %v555 = vadd.f32 0.0, %v554
    %556 = vmatmul.f32.gmra.mxu0 %v404
    %v557 = vpop.f32.mrf.mxu0
    %v558 = vadd.f32 0.0, %v557
    %559 = vmatmul.f32.gmra.mxu0 %v405
    %v560 = vpop.f32.mrf.mxu0
    %v561 = vadd.f32 0.0, %v560
    %562 = vmatmul.f32.gmra.mxu0 %v406
    %v563 = vpop.f32.mrf.mxu0
    %v564 = vadd.f32 0.0, %v563
    %565 = vmatmul.f32.gmra.mxu0 %v407
    %v566 = vpop.f32.mrf.mxu0
    %v567 = vadd.f32 0.0, %v566
    %568 = vmatmul.f32.gmra.mxu0 %v408
    %v569 = vpop.f32.mrf.mxu0
    %v570 = vadd.f32 0.0, %v569
    %571 = vmatmul.f32.gmra.mxu0 %v409
    %v572 = vpop.f32.mrf.mxu0
    %v573 = vadd.f32 0.0, %v572
    %574 = vmatmul.f32.gmra.mxu0 %v410
    %v575 = vpop.f32.mrf.mxu0
    %v576 = vadd.f32 0.0, %v575
    %577 = vmatmul.f32.gmra.mxu0 %v411
    %v578 = vpop.f32.mrf.mxu0
    %v579 = vadd.f32 0.0, %v578
    %580 = vmatmul.f32.gmra.mxu0 %v412
    %v581 = vpop.f32.mrf.mxu0
    %v582 = vadd.f32 0.0, %v581
    %583 = vmatmul.f32.gmra.mxu0 %v413
    %v584 = vpop.f32.mrf.mxu0
    %v585 = vadd.f32 0.0, %v584
    %586 = vmatmul.f32.gmra.mxu0 %v414
    %v587 = vpop.f32.mrf.mxu0
    %v588 = vadd.f32 0.0, %v587
    %589 = vmatmul.f32.gmra.mxu0 %v415
    %v590 = vpop.f32.mrf.mxu0
    %v591 = vadd.f32 0.0, %v590
    %592 = vmatmul.f32.gmra.mxu0 %v416
    %v593 = vpop.f32.mrf.mxu0
    %v594 = vadd.f32 0.0, %v593
    %595 = vdwg.mxu0
    %596 = vmatpush.msra.mxu0 %v513
    %597 = vmatpush.msra.mxu0 %v512
    %598 = vmatpush.msra.mxu0 %v511
    %599 = vmatpush.msra.mxu0 %v510
    %600 = vmatpush.msra.mxu0 %v509
    %601 = vmatpush.msra.mxu0 %v508
    %602 = vmatpush.msra.mxu0 %v507
    %603 = vmatpush.msra.mxu0 %v506
    %604 = vmatpush.msra.mxu0 %v505
    %605 = vmatpush.msra.mxu0 %v504
    %606 = vmatpush.msra.mxu0 %v503
    %607 = vmatpush.msra.mxu0 %v502
    %608 = vmatpush.msra.mxu0 %v501
    %609 = vmatpush.msra.mxu0 %v500
    %610 = vmatpush.msra.mxu0 %v499
    %611 = vmatpush.msra.mxu0 %v498
    %612 = vmatmul.f32.gmra.mxu0 %v450
    %v613 = vpop.f32.mrf.mxu0
    %v614 = vadd.f32 %v549, %v613
    %615 = vmatmul.f32.gmra.mxu0 %v451
    %v616 = vpop.f32.mrf.mxu0
    %v617 = vadd.f32 %v552, %v616
    %618 = vmatmul.f32.gmra.mxu0 %v452
    %v619 = vpop.f32.mrf.mxu0
    %v620 = vadd.f32 %v555, %v619
    %621 = vmatmul.f32.gmra.mxu0 %v453
    %v622 = vpop.f32.mrf.mxu0
    %v623 = vadd.f32 %v558, %v622
    %624 = vmatmul.f32.gmra.mxu0 %v454
    %v625 = vpop.f32.mrf.mxu0
    %v626 = vadd.f32 %v561, %v625
    %627 = vmatmul.f32.gmra.mxu0 %v455
    %v628 = vpop.f32.mrf.mxu0
    %v629 = vadd.f32 %v564, %v628
    %630 = vmatmul.f32.gmra.mxu0 %v456
    %v631 = vpop.f32.mrf.mxu0
    %v632 = vadd.f32 %v567, %v631
    %633 = vmatmul.f32.gmra.mxu0 %v457
    %v634 = vpop.f32.mrf.mxu0
    %v635 = vadd.f32 %v570, %v634
    %636 = vmatmul.f32.gmra.mxu0 %v458
    %v637 = vpop.f32.mrf.mxu0
    %v638 = vadd.f32 %v573, %v637
    %639 = vmatmul.f32.gmra.mxu0 %v459
    %v640 = vpop.f32.mrf.mxu0
    %v641 = vadd.f32 %v576, %v640
    %642 = vmatmul.f32.gmra.mxu0 %v460
    %v643 = vpop.f32.mrf.mxu0
    %v644 = vadd.f32 %v579, %v643
    %645 = vmatmul.f32.gmra.mxu0 %v461
    %v646 = vpop.f32.mrf.mxu0
    %v647 = vadd.f32 %v582, %v646
    %648 = vmatmul.f32.gmra.mxu0 %v462
    %v649 = vpop.f32.mrf.mxu0
    %v650 = vadd.f32 %v585, %v649
    %651 = vmatmul.f32.gmra.mxu0 %v463
    %v652 = vpop.f32.mrf.mxu0
    %v653 = vadd.f32 %v588, %v652
    %654 = vmatmul.f32.gmra.mxu0 %v464
    %v655 = vpop.f32.mrf.mxu0
    %v656 = vadd.f32 %v591, %v655
    %657 = vmatmul.f32.gmra.mxu0 %v465
    %v658 = vpop.f32.mrf.mxu0
    %v659 = vadd.f32 %v594, %v658
    %660 = vdwg.mxu0
    %s661 = scalar_lea.vmem [#allocation7], 256
    %v662 = vld [vmem:[%s661] sm:$0xff]
    %v663 = vld [vmem:[%s661 + $0x8] sm:$0xff]
    %v664 = vld [vmem:[%s661 + $0x10] sm:$0xff]
    %v665 = vld [vmem:[%s661 + $0x18] sm:$0xff]
    %v666 = vld [vmem:[%s661 + $0x20] sm:$0xff]
    %v667 = vld [vmem:[%s661 + $0x28] sm:$0xff]
    %v668 = vld [vmem:[%s661 + $0x30] sm:$0xff]
    %v669 = vld [vmem:[%s661 + $0x38] sm:$0xff]
    %v670 = vld [vmem:[%s661 + $0x40] sm:$0xff]
    %v671 = vld [vmem:[%s661 + $0x48] sm:$0xff]
    %v672 = vld [vmem:[%s661 + $0x50] sm:$0xff]
    %v673 = vld [vmem:[%s661 + $0x58] sm:$0xff]
    %v674 = vld [vmem:[%s661 + $0x60] sm:$0xff]
    %v675 = vld [vmem:[%s661 + $0x68] sm:$0xff]
    %v676 = vld [vmem:[%s661 + $0x70] sm:$0xff]
    %v677 = vld [vmem:[%s661 + $0x78] sm:$0xff]
    %678 = vmatpush.msra.mxu0 %v677
    %679 = vmatpush.msra.mxu0 %v676
    %680 = vmatpush.msra.mxu0 %v675
    %681 = vmatpush.msra.mxu0 %v674
    %682 = vmatpush.msra.mxu0 %v673
    %683 = vmatpush.msra.mxu0 %v672
    %684 = vmatpush.msra.mxu0 %v671
    %685 = vmatpush.msra.mxu0 %v670
    %686 = vmatpush.msra.mxu0 %v669
    %687 = vmatpush.msra.mxu0 %v668
    %688 = vmatpush.msra.mxu0 %v667
    %689 = vmatpush.msra.mxu0 %v666
    %690 = vmatpush.msra.mxu0 %v665
    %691 = vmatpush.msra.mxu0 %v664
    %692 = vmatpush.msra.mxu0 %v663
    %693 = vmatpush.msra.mxu0 %v662
    %694 = vmatmul.f32.gmra.mxu0 %v482
    %v695 = vpop.f32.mrf.mxu0
    %v696 = vadd.f32 0.0, %v695
    %697 = vmatmul.f32.gmra.mxu0 %v483
    %v698 = vpop.f32.mrf.mxu0
    %v699 = vadd.f32 0.0, %v698
    %700 = vmatmul.f32.gmra.mxu0 %v484
    %v701 = vpop.f32.mrf.mxu0
    %v702 = vadd.f32 0.0, %v701
    %703 = vmatmul.f32.gmra.mxu0 %v485
    %v704 = vpop.f32.mrf.mxu0
    %v705 = vadd.f32 0.0, %v704
    %706 = vmatmul.f32.gmra.mxu0 %v486
    %v707 = vpop.f32.mrf.mxu0
    %v708 = vadd.f32 0.0, %v707
    %709 = vmatmul.f32.gmra.mxu0 %v487
    %v710 = vpop.f32.mrf.mxu0
    %v711 = vadd.f32 0.0, %v710
    %712 = vmatmul.f32.gmra.mxu0 %v488
    %v713 = vpop.f32.mrf.mxu0
    %v714 = vadd.f32 0.0, %v713
    %715 = vmatmul.f32.gmra.mxu0 %v489
    %v716 = vpop.f32.mrf.mxu0
    %v717 = vadd.f32 0.0, %v716
    %718 = vmatmul.f32.gmra.mxu0 %v490
    %v719 = vpop.f32.mrf.mxu0
    %v720 = vadd.f32 0.0, %v719
    %721 = vmatmul.f32.gmra.mxu0 %v491
    %v722 = vpop.f32.mrf.mxu0
    %v723 = vadd.f32 0.0, %v722
    %724 = vmatmul.f32.gmra.mxu0 %v492
    %v725 = vpop.f32.mrf.mxu0
    %v726 = vadd.f32 0.0, %v725
    %727 = vmatmul.f32.gmra.mxu0 %v493
    %v728 = vpop.f32.mrf.mxu0
    %v729 = vadd.f32 0.0, %v728
    %730 = vmatmul.f32.gmra.mxu0 %v494
    %v731 = vpop.f32.mrf.mxu0
    %v732 = vadd.f32 0.0, %v731
    %733 = vmatmul.f32.gmra.mxu0 %v495
    %v734 = vpop.f32.mrf.mxu0
    %v735 = vadd.f32 0.0, %v734
    %736 = vmatmul.f32.gmra.mxu0 %v496
    %v737 = vpop.f32.mrf.mxu0
    %v738 = vadd.f32 0.0, %v737
    %739 = vmatmul.f32.gmra.mxu0 %v497
    %v740 = vpop.f32.mrf.mxu0
    %v741 = vadd.f32 0.0, %v740
    %742 = vdwg.mxu0
    %v743 = vadd.f32 %v614, %v696
    %v744 = vadd.f32 %v617, %v699
    %v745 = vadd.f32 %v620, %v702
    %v746 = vadd.f32 %v623, %v705
    %v747 = vadd.f32 %v626, %v708
    %v748 = vadd.f32 %v629, %v711
    %v749 = vadd.f32 %v632, %v714
    %v750 = vadd.f32 %v635, %v717
    %v751 = vadd.f32 %v638, %v720
    %v752 = vadd.f32 %v641, %v723
    %v753 = vadd.f32 %v644, %v726
    %v754 = vadd.f32 %v647, %v729
    %v755 = vadd.f32 %v650, %v732
    %v756 = vadd.f32 %v653, %v735
    %v757 = vadd.f32 %v656, %v738
    %v758 = vadd.f32 %v659, %v741
    %v759 = vld [vmem:[#allocation8] sm:$0xff]
    %v760 = vld [vmem:[#allocation8 + $0x8] sm:$0xff]
    %v761 = vld [vmem:[#allocation8 + $0x10] sm:$0xff]
    %v762 = vld [vmem:[#allocation8 + $0x18] sm:$0xff]
    %v763 = vld [vmem:[#allocation8 + $0x20] sm:$0xff]
    %v764 = vld [vmem:[#allocation8 + $0x28] sm:$0xff]
    %v765 = vld [vmem:[#allocation8 + $0x30] sm:$0xff]
    %v766 = vld [vmem:[#allocation8 + $0x38] sm:$0xff]
    %v767 = vld [vmem:[#allocation8 + $0x40] sm:$0xff]
    %v768 = vld [vmem:[#allocation8 + $0x48] sm:$0xff]
    %v769 = vld [vmem:[#allocation8 + $0x50] sm:$0xff]
    %v770 = vld [vmem:[#allocation8 + $0x58] sm:$0xff]
    %v771 = vld [vmem:[#allocation8 + $0x60] sm:$0xff]
    %v772 = vld [vmem:[#allocation8 + $0x68] sm:$0xff]
    %v773 = vld [vmem:[#allocation8 + $0x70] sm:$0xff]
    %v774 = vld [vmem:[#allocation8 + $0x78] sm:$0xff]
    %775 = vmatpush.msra.mxu0 %v774
    %776 = vmatpush.msra.mxu0 %v773
    %777 = vmatpush.msra.mxu0 %v772
    %778 = vmatpush.msra.mxu0 %v771
    %779 = vmatpush.msra.mxu0 %v770
    %780 = vmatpush.msra.mxu0 %v769
    %781 = vmatpush.msra.mxu0 %v768
    %782 = vmatpush.msra.mxu0 %v767
    %783 = vmatpush.msra.mxu0 %v766
    %784 = vmatpush.msra.mxu0 %v765
    %785 = vmatpush.msra.mxu0 %v764
    %786 = vmatpush.msra.mxu0 %v763
    %787 = vmatpush.msra.mxu0 %v762
    %788 = vmatpush.msra.mxu0 %v761
    %789 = vmatpush.msra.mxu0 %v760
    %790 = vmatpush.msra.mxu0 %v759
    %791 = vmatmul.f32.gmra.mxu0 %v87
    %v792 = vpop.f32.mrf.mxu0
    %v793 = vadd.f32 0.0, %v792
    %794 = vmatmul.f32.gmra.mxu0 %v88
    %v795 = vpop.f32.mrf.mxu0
    %v796 = vadd.f32 0.0, %v795
    %797 = vmatmul.f32.gmra.mxu0 %v89
    %v798 = vpop.f32.mrf.mxu0
    %v799 = vadd.f32 0.0, %v798
    %800 = vmatmul.f32.gmra.mxu0 %v90
    %v801 = vpop.f32.mrf.mxu0
    %v802 = vadd.f32 0.0, %v801
    %803 = vmatmul.f32.gmra.mxu0 %v91
    %v804 = vpop.f32.mrf.mxu0
    %v805 = vadd.f32 0.0, %v804
    %806 = vmatmul.f32.gmra.mxu0 %v92
    %v807 = vpop.f32.mrf.mxu0
    %v808 = vadd.f32 0.0, %v807
    %809 = vmatmul.f32.gmra.mxu0 %v93
    %v810 = vpop.f32.mrf.mxu0
    %v811 = vadd.f32 0.0, %v810
    %812 = vmatmul.f32.gmra.mxu0 %v94
    %v813 = vpop.f32.mrf.mxu0
    %v814 = vadd.f32 0.0, %v813
    %815 = vmatmul.f32.gmra.mxu0 %v95
    %v816 = vpop.f32.mrf.mxu0
    %v817 = vadd.f32 0.0, %v816
    %818 = vmatmul.f32.gmra.mxu0 %v96
    %v819 = vpop.f32.mrf.mxu0
    %v820 = vadd.f32 0.0, %v819
    %821 = vmatmul.f32.gmra.mxu0 %v97
    %v822 = vpop.f32.mrf.mxu0
    %v823 = vadd.f32 0.0, %v822
    %824 = vmatmul.f32.gmra.mxu0 %v98
    %v825 = vpop.f32.mrf.mxu0
    %v826 = vadd.f32 0.0, %v825
    %827 = vmatmul.f32.gmra.mxu0 %v99
    %v828 = vpop.f32.mrf.mxu0
    %v829 = vadd.f32 0.0, %v828
    %830 = vmatmul.f32.gmra.mxu0 %v100
    %v831 = vpop.f32.mrf.mxu0
    %v832 = vadd.f32 0.0, %v831
    %833 = vmatmul.f32.gmra.mxu0 %v101
    %v834 = vpop.f32.mrf.mxu0
    %v835 = vadd.f32 0.0, %v834
    %836 = vmatmul.f32.gmra.mxu0 %v102
    %v837 = vpop.f32.mrf.mxu0
    %v838 = vadd.f32 0.0, %v837
    %839 = vdwg.mxu0
    %v840 = vadd.f32 %v743, %v793
    %v841 = vadd.f32 %v744, %v796
    %v842 = vadd.f32 %v745, %v799
    %v843 = vadd.f32 %v746, %v802
    %v844 = vadd.f32 %v747, %v805
    %v845 = vadd.f32 %v748, %v808
    %v846 = vadd.f32 %v749, %v811
    %v847 = vadd.f32 %v750, %v814
    %v848 = vadd.f32 %v751, %v817
    %v849 = vadd.f32 %v752, %v820
    %v850 = vadd.f32 %v753, %v823
    %v851 = vadd.f32 %v754, %v826
    %v852 = vadd.f32 %v755, %v829
    %v853 = vadd.f32 %v756, %v832
    %v854 = vadd.f32 %v757, %v835
    %v855 = vadd.f32 %v758, %v838
    %v856 = vld [vmem:[%s5] sm:$0x1]
    %v858 = vperm.slane %v856, 0
    %v860 = vadd.f32 %v840, %v858
    %v861 = vadd.f32 %v841, %v858
    %v862 = vadd.f32 %v842, %v858
    %v863 = vadd.f32 %v843, %v858
    %v864 = vadd.f32 %v844, %v858
    %v865 = vadd.f32 %v845, %v858
    %v866 = vadd.f32 %v846, %v858
    %v867 = vadd.f32 %v847, %v858
    %v868 = vadd.f32 %v848, %v858
    %v869 = vadd.f32 %v849, %v858
    %v870 = vadd.f32 %v850, %v858
    %v871 = vadd.f32 %v851, %v858
    %v872 = vadd.f32 %v852, %v858
    %v873 = vadd.f32 %v853, %v858
    %v874 = vadd.f32 %v854, %v858
    %v875 = vadd.f32 %v855, %v858
    %v876 = vmax.f32 %v860, 0.0
    %v877 = vmax.f32 %v861, 0.0
    %v878 = vmax.f32 %v862, 0.0
    %v879 = vmax.f32 %v863, 0.0
    %v880 = vmax.f32 %v864, 0.0
    %v881 = vmax.f32 %v865, 0.0
    %v882 = vmax.f32 %v866, 0.0
    %v883 = vmax.f32 %v867, 0.0
    %v884 = vmax.f32 %v868, 0.0
    %v885 = vmax.f32 %v869, 0.0
    %v886 = vmax.f32 %v870, 0.0
    %v887 = vmax.f32 %v871, 0.0
    %v888 = vmax.f32 %v872, 0.0
    %v889 = vmax.f32 %v873, 0.0
    %v890 = vmax.f32 %v874, 0.0
    %v891 = vmax.f32 %v875, 0.0
    %892 = vst [vmem:[#allocation10] sm:$0xff] %v876
    %893 = vst [vmem:[#allocation10 + $0x8] sm:$0xff] %v877
    %894 = vst [vmem:[#allocation10 + $0x10] sm:$0xff] %v878
    %895 = vst [vmem:[#allocation10 + $0x18] sm:$0xff] %v879
    %896 = vst [vmem:[#allocation10 + $0x20] sm:$0xff] %v880
    %897 = vst [vmem:[#allocation10 + $0x28] sm:$0xff] %v881
    %898 = vst [vmem:[#allocation10 + $0x30] sm:$0xff] %v882
    %899 = vst [vmem:[#allocation10 + $0x38] sm:$0xff] %v883
    %900 = vst [vmem:[#allocation10 + $0x40] sm:$0xff] %v884
    %901 = vst [vmem:[#allocation10 + $0x48] sm:$0xff] %v885
    %902 = vst [vmem:[#allocation10 + $0x50] sm:$0xff] %v886
    %903 = vst [vmem:[#allocation10 + $0x58] sm:$0xff] %v887
    %904 = vst [vmem:[#allocation10 + $0x60] sm:$0xff] %v888
    %905 = vst [vmem:[#allocation10 + $0x68] sm:$0xff] %v889
    %906 = vst [vmem:[#allocation10 + $0x70] sm:$0xff] %v890
    %907 = vst [vmem:[#allocation10 + $0x78] sm:$0xff] %v891
    // Predicated region
    $region42: #{tpu_custom_call.1} parent=1 // pred_check
      _
    $region43: #{tpu_custom_call.1} parent=1 // pred_check_branch
      %909 = sbr.rel (0) target = $region45
    $region44: #{tpu_custom_call.1} parent=1 // pred_region
      %911 = vsyncadd [#allocation4], 0
      %s912 = sshll.u32 [#allocation10], 4
      %s913 = int_to_ptr.vmem [resolvable:$true] %s912
      %s914 = sshll.u32 %s6, 4
      %s915 = int_to_ptr.hbm [resolvable:$true] %s914
      %920 = dma.vmem_to_hbm [thread:$0]  %s913, 2048, %s915, [#allocation4], 128, 128, 8
    $region45: #{tpu_custom_call.1} parent=1 // pred_fallthru
      _
    // Predicated region
    $region46: #{tpu_custom_call.1} parent=1 // pred_check
      _
    $region47: #{tpu_custom_call.1} parent=1 // pred_check_branch
      %922 = sbr.rel (0) target = $region49
    $region48: #{tpu_custom_call.1} parent=1 // pred_region
      %924 = dma.done [#allocation4], 2048
    $region49: #{tpu_custom_call.1} parent=1 // pred_fallthru
      _
    %925 = vsyncpa [#allocation3], 1
    %926 = vsyncpa [#allocation6], 1
    %927 = vsyncpa [#allocation9], 1
    %928 = vsyncpa [#allocation4], 1

</llo_original>
